<compile_context>
chip_gen: v7x
topology: tpu7x:2x2x1
jax: 0.10.0
libtpu: 0.0.40
codegen_flags: <defaults>
</compile_context>

<pallas_src>
import functools

import jax
import jax.numpy as jnp
from jax.experimental import pallas as pl
from jax.experimental.pallas import tpu as pltpu


_LANE = 128     # lane width: output minor dim padded to 128 for lane-dense stores
_SUBLANE = 8    # f32 sublane packing


def _round_up(x: int, m: int) -> int:
    return ((x + m - 1) // m) * m


def _cdiv(a: int, b: int) -> int:
    return (a + b - 1) // b


def _choose_batch_tile(batch: int, tb_max: int = 1024):
    """Pick (TB, padded_batch), TB a multiple of 8 (256-aligned when multi-step).

    Single grid step whenever the batch fits one tile (grid steps are a serial
    loop on single-TC chips, so splitting only adds ~0.35us/step overhead).
    For large batches, choose the step count first and size TB to minimize
    padding while keeping MXU row tiles 256-aligned.
    """
    b8 = _round_up(max(batch, 1), _SUBLANE)
    if b8 <= tb_max:
        return b8, b8
    num_steps = _cdiv(b8, tb_max)
    tb = _round_up(_cdiv(b8, num_steps), 256)
    return tb, tb * num_steps


def _mlp_kernel(x_ref, w1_ref, b1_ref, w2_ref, b2_ref, w3_ref, b3_ref, o_ref):
    # x: (TB, Din); w1: (Din, H); w2: (H, H); w3: (H, Dout_pad)
    # MXU matmuls accumulate in f32; bias-add / ReLU stay f32 on the VPU.
    w_dtype = w1_ref.dtype
    h = jnp.dot(x_ref[...], w1_ref[...], preferred_element_type=jnp.float32)
    h = jnp.maximum(h + b1_ref[...], 0.0)
    h = jnp.dot(h.astype(w_dtype), w2_ref[...], preferred_element_type=jnp.float32)
    h = jnp.maximum(h + b2_ref[...], 0.0)
    o = jnp.dot(h.astype(w_dtype), w3_ref[...], preferred_element_type=jnp.float32)
    o_ref[...] = (o + b3_ref[...]).astype(o_ref.dtype)


def prepare_params(params, *, use_bf16=True):
    """One-time conversion of (w1,b1,w2,b2,w3,b3) into kernel layout.

    - W3 / b3 are zero-padded along the output dim to a multiple of 128 so the
      kernel's output block is lane-dense.  Padded columns are exactly zero,
      so the math is unchanged; the wrapper slices the real columns back out.
    - Biases are reshaped to (1, N) rows and stay f32 (added to f32 accum).
    - Weights are optionally cast to bf16 (default): fewer MXU passes, f32
      accumulation keeps results sound (looser than pure f32 by ~bf16 eps).
    """
    w1, b1, w2, b2, w3, b3 = params
    H = w1.shape[1]
    d_out = w3.shape[1]
    d_out_pad = _round_up(d_out, _LANE)

    w3p = jnp.pad(w3, ((0, 0), (0, d_out_pad - d_out)))
    b3p = jnp.pad(b3, ((0, d_out_pad - d_out),)).reshape(1, d_out_pad)
    b1r = b1.reshape(1, H).astype(jnp.float32)
    b2r = b2.reshape(1, H).astype(jnp.float32)
    b3p = b3p.astype(jnp.float32)

    w_dtype = jnp.bfloat16 if use_bf16 else jnp.float32
    return (w1.astype(w_dtype), b1r, w2.astype(w_dtype), b2r,
            w3p.astype(w_dtype), b3p)


@functools.partial(jax.jit, static_argnames=("n_output_timesteps", "n_dim"))
def aug_prediction_forward(x, prepared_params, *, n_output_timesteps, n_dim):
    """x: (B, n_input_timesteps, n_dim) -> (B, n_output_timesteps, n_dim).

    `prepared_params` must come from prepare_params() (done once, off the
    per-call path).
    """
    w1, b1, w2, b2, w3, b3 = prepared_params
    B = x.shape[0]
    d_in = x.shape[1] * x.shape[2]
    d_out = n_output_timesteps * n_dim
    H = w1.shape[1]
    d_out_pad = w3.shape[1]

    # Matches PyTorch .view(-1, n_dim * n_input_timesteps) (row-major flatten).
    x2d = x.reshape(B, d_in).astype(w1.dtype)

    TB, B_pad = _choose_batch_tile(B)
    if B_pad != B:
        x2d = jnp.pad(x2d, ((0, B_pad - B), (0, 0)))

    grid = (B_pad // TB,)

    flops = 2 * B_pad * (d_in * H + H * H + H * d_out_pad)
    bytes_accessed = (
        B_pad * d_in * x2d.dtype.itemsize
        + (d_in * H + H * H + H * d_out_pad) * w1.dtype.itemsize
        + (2 * H + d_out_pad) * 4
        + B_pad * d_out_pad * 4
    )

    out = pl.pallas_call(
        _mlp_kernel,
        out_shape=jax.ShapeDtypeStruct((B_pad, d_out_pad), jnp.float32),
        grid_spec=pltpu.PrefetchScalarGridSpec(
            num_scalar_prefetch=0,
            grid=grid,
            in_specs=[
                pl.BlockSpec((TB, d_in), lambda i: (i, 0)),        # x tile
                pl.BlockSpec((d_in, H), lambda i: (0, 0)),         # W1 (resident)
                pl.BlockSpec((1, H), lambda i: (0, 0)),            # b1
                pl.BlockSpec((H, H), lambda i: (0, 0)),            # W2 (resident)
                pl.BlockSpec((1, H), lambda i: (0, 0)),            # b2
                pl.BlockSpec((H, d_out_pad), lambda i: (0, 0)),    # W3 (resident)
                pl.BlockSpec((1, d_out_pad), lambda i: (0, 0)),    # b3
            ],
            out_specs=pl.BlockSpec((TB, d_out_pad), lambda i: (i, 0)),
        ),
        compiler_params=pltpu.CompilerParams(
            dimension_semantics=("parallel",),
            vmem_limit_bytes=32 * 1024 * 1024,
        ),
        cost_estimate=pl.CostEstimate(
            flops=flops, transcendentals=0, bytes_accessed=bytes_accessed
        ),
    )(x2d, w1, b1, w2, b2, w3, b3)

    out = out[:B, :d_out]
    return out.reshape(B, n_output_timesteps, n_dim)


def init_params(key, n_dim, n_input_timesteps, n_output_timesteps, hidden=512):
    """Deterministic init mimicking PyTorch nn.Linear default (U[-1/sqrt(fan_in), 1/sqrt(fan_in)])."""
    d_in = n_dim * n_input_timesteps
    d_out = n_dim * n_output_timesteps
    keys = jax.random.split(key, 6)

    def lin(kw, kb, fan_in, fan_out):
        bound = 1.0 / jnp.sqrt(jnp.float32(fan_in))
        w = jax.random.uniform(kw, (fan_in, fan_out), jnp.float32, -bound, bound)
        b = jax.random.uniform(kb, (fan_out,), jnp.float32, -bound, bound)
        return w, b

    w1, b1 = lin(keys[0], keys[1], d_in, hidden)
    w2, b2 = lin(keys[2], keys[3], hidden, hidden)
    w3, b3 = lin(keys[4], keys[5], hidden, d_out)
    return (w1, b1, w2, b2, w3, b3)


def reference_forward(x, params, n_output_timesteps, n_dim):
    w1, b1, w2, b2, w3, b3 = params
    B = x.shape[0]
    h = x.reshape(B, -1)
    h = jnp.maximum(h @ w1 + b1, 0.0)
    h = jnp.maximum(h @ w2 + b2, 0.0)
    o = h @ w3 + b3
    return o.reshape(B, n_output_timesteps, n_dim)


if __name__ == "__main__":
    n_dim = 4
    n_input_timesteps = 8
    n_output_timesteps = 8

    key = jax.random.PRNGKey(0)
    kx, kp, kx2 = jax.random.split(key, 3)
    params = init_params(kp, n_dim, n_input_timesteps, n_output_timesteps)

    # Params are prepared ONCE (pad + cast), off the per-call path.
    prep_f32 = prepare_params(params, use_bf16=False)
    prep_bf16 = prepare_params(params, use_bf16=True)   # default fast path

    # 1) Small-batch correctness check on the exact f32 path (tight tolerance).
    B = 2
    x = jax.random.normal(kx, (B, n_input_timesteps, n_dim), jnp.float32)
    out = aug_prediction_forward(
        x, prep_f32, n_output_timesteps=n_output_timesteps, n_dim=n_dim
    )
    out = jax.block_until_ready(out)
    ref = reference_forward(x, params, n_output_timesteps, n_dim)
    assert out.shape == (B, n_output_timesteps, n_dim), out.shape
    assert jnp.allclose(out, ref, atol=1e-5, rtol=1e-5), float(
        jnp.max(jnp.abs(out - ref))
    )

    # 2) Default bf16 fast path on the same small batch (f32 accumulation,
    #    so only ~bf16-eps looser than the reference).
    out_b = aug_prediction_forward(
        x, prep_bf16, n_output_timesteps=n_output_timesteps, n_dim=n_dim
    )
    out_b = jax.block_until_ready(out_b)
    assert jnp.allclose(out_b, ref, atol=5e-2, rtol=5e-2), float(
        jnp.max(jnp.abs(out_b - ref))
    )

    # 3) Larger, non-multiple-of-8 batch: exercises batch padding and the
    #    single fat-tile path (no serial grid split) with bf16 weights.
    B2 = 300
    x2 = jax.random.normal(kx2, (B2, n_input_timesteps, n_dim), jnp.float32)
    out2 = aug_prediction_forward(
        x2, prep_bf16, n_output_timesteps=n_output_timesteps, n_dim=n_dim
    )
    out2 = jax.block_until_ready(out2)
    ref2 = reference_forward(x2, params, n_output_timesteps, n_dim)
    assert out2.shape == (B2, n_output_timesteps, n_dim), out2.shape
    assert jnp.allclose(out2, ref2, atol=1e-1, rtol=1e-1), float(
        jnp.max(jnp.abs(out2 - ref2))
    )

    print("KERNEL_OK")
</pallas_src>

<mosaic_0001>
module attributes {stable_mosaic.version = 11 : i64} {
  func.func @_mlp_kernel(%arg0: i32, %arg1: memref<8x32xf32, #tpu.memory_space<vmem>>, %arg2: memref<32x512xf32, #tpu.memory_space<vmem>>, %arg3: memref<1x512xf32, #tpu.memory_space<vmem>>, %arg4: memref<512x512xf32, #tpu.memory_space<vmem>>, %arg5: memref<1x512xf32, #tpu.memory_space<vmem>>, %arg6: memref<512x128xf32, #tpu.memory_space<vmem>>, %arg7: memref<1x128xf32, #tpu.memory_space<vmem>>, %arg8: memref<8x128xf32, #tpu.memory_space<vmem>>) attributes {dimension_semantics = [#tpu.dimension_semantics<parallel>], iteration_bounds = array<i64: 1>, scalar_prefetch = 0 : i64, scratch_operands = 0 : i64, tpu.core_type = #tpu.core_type<tc>, window_params = [{transform_indices = @transform_0, window_bounds = array<i64: 8, 32>}, {pipeline_mode = #tpu.pipeline_mode<synchronous>, transform_indices = @transform_1, window_bounds = array<i64: 32, 512>}, {pipeline_mode = #tpu.pipeline_mode<synchronous>, transform_indices = @transform_2, window_bounds = array<i64: 1, 512>}, {pipeline_mode = #tpu.pipeline_mode<synchronous>, transform_indices = @transform_3, window_bounds = array<i64: 512, 512>}, {pipeline_mode = #tpu.pipeline_mode<synchronous>, transform_indices = @transform_4, window_bounds = array<i64: 1, 512>}, {pipeline_mode = #tpu.pipeline_mode<synchronous>, transform_indices = @transform_5, window_bounds = array<i64: 512, 128>}, {pipeline_mode = #tpu.pipeline_mode<synchronous>, transform_indices = @transform_6, window_bounds = array<i64: 1, 128>}, {transform_indices = @transform_7, window_bounds = array<i64: 8, 128>}]} {
    %c0 = arith.constant 0 : index
    %c0_0 = arith.constant 0 : index
    %0 = vector.load %arg1[%c0, %c0_0] : memref<8x32xf32, #tpu.memory_space<vmem>>, vector<8x32xf32>
    %c0_1 = arith.constant 0 : index
    %c0_2 = arith.constant 0 : index
    %1 = vector.load %arg2[%c0_1, %c0_2] : memref<32x512xf32, #tpu.memory_space<vmem>>, vector<32x512xf32>
    %cst = arith.constant dense<0.000000e+00> : vector<8x512xf32>
    %2 = tpu.matmul %0, %1, %cst {dimension_numbers = #tpu.dot_dimension_numbers<[1], [0], [0], [1], [0, 0, 1, 1], [], []>} : vector<8x32xf32>, vector<32x512xf32>, vector<8x512xf32> -> vector<8x512xf32>
    %c0_3 = arith.constant 0 : index
    %c0_4 = arith.constant 0 : index
    %3 = vector.load %arg3[%c0_3, %c0_4] : memref<1x512xf32, #tpu.memory_space<vmem>>, vector<1x512xf32>
    %4 = vector.broadcast %3 : vector<1x512xf32> to vector<8x512xf32>
    %5 = arith.addf %2, %4 : vector<8x512xf32>
    %cst_5 = arith.constant 0.000000e+00 : f32
    %6 = vector.broadcast %cst_5 : f32 to vector<8x512xf32>
    %7 = arith.maximumf %5, %6 : vector<8x512xf32>
    %c0_6 = arith.constant 0 : index
    %c0_7 = arith.constant 0 : index
    %8 = vector.load %arg4[%c0_6, %c0_7] : memref<512x512xf32, #tpu.memory_space<vmem>>, vector<512x512xf32>
    %cst_8 = arith.constant dense<0.000000e+00> : vector<8x512xf32>
    %9 = tpu.matmul %7, %8, %cst_8 {dimension_numbers = #tpu.dot_dimension_numbers<[1], [0], [0], [1], [0, 0, 1, 1], [], []>} : vector<8x512xf32>, vector<512x512xf32>, vector<8x512xf32> -> vector<8x512xf32>
    %c0_9 = arith.constant 0 : index
    %c0_10 = arith.constant 0 : index
    %10 = vector.load %arg5[%c0_9, %c0_10] : memref<1x512xf32, #tpu.memory_space<vmem>>, vector<1x512xf32>
    %11 = vector.broadcast %10 : vector<1x512xf32> to vector<8x512xf32>
    %12 = arith.addf %9, %11 : vector<8x512xf32>
    %cst_11 = arith.constant 0.000000e+00 : f32
    %13 = vector.broadcast %cst_11 : f32 to vector<8x512xf32>
    %14 = arith.maximumf %12, %13 : vector<8x512xf32>
    %c0_12 = arith.constant 0 : index
    %c0_13 = arith.constant 0 : index
    %15 = vector.load %arg6[%c0_12, %c0_13] : memref<512x128xf32, #tpu.memory_space<vmem>>, vector<512x128xf32>
    %cst_14 = arith.constant dense<0.000000e+00> : vector<8x128xf32>
    %16 = tpu.matmul %14, %15, %cst_14 {dimension_numbers = #tpu.dot_dimension_numbers<[1], [0], [0], [1], [0, 0, 1, 1], [], []>} : vector<8x512xf32>, vector<512x128xf32>, vector<8x128xf32> -> vector<8x128xf32>
    %c0_15 = arith.constant 0 : index
    %c0_16 = arith.constant 0 : index
    %17 = vector.load %arg7[%c0_15, %c0_16] : memref<1x128xf32, #tpu.memory_space<vmem>>, vector<1x128xf32>
    %18 = vector.broadcast %17 : vector<1x128xf32> to vector<8x128xf32>
    %19 = arith.addf %16, %18 : vector<8x128xf32>
    %c0_17 = arith.constant 0 : index
    %c0_18 = arith.constant 0 : index
    %20 = vector.load %arg8[%c0_17, %c0_18] : memref<8x128xf32, #tpu.memory_space<vmem>>, vector<8x128xf32>
    tpu.vector_store %arg8[%c0_17, %c0_18], %19 {strides = array<i32>} : memref<8x128xf32, #tpu.memory_space<vmem>>, vector<8x128xf32>,
    return
  }
  func.func @transform_0(%arg0: i32) -> (i32, i32) {
    %c0_i32 = arith.constant 0 : i32
    %c0_i32_0 = arith.constant 0 : i32
    return %arg0, %c0_i32 : i32, i32
  }
  func.func @transform_1(%arg0: i32) -> (i32, i32) {
    %c0_i32 = arith.constant 0 : i32
    %c0_i32_0 = arith.constant 0 : i32
    %c0_i32_1 = arith.constant 0 : i32
    return %c0_i32, %c0_i32_0 : i32, i32
  }
  func.func @transform_2(%arg0: i32) -> (i32, i32) {
    %c0_i32 = arith.constant 0 : i32
    %c0_i32_0 = arith.constant 0 : i32
    %c0_i32_1 = arith.constant 0 : i32
    return %c0_i32, %c0_i32_0 : i32, i32
  }
  func.func @transform_3(%arg0: i32) -> (i32, i32) {
    %c0_i32 = arith.constant 0 : i32
    %c0_i32_0 = arith.constant 0 : i32
    %c0_i32_1 = arith.constant 0 : i32
    return %c0_i32, %c0_i32_0 : i32, i32
  }
  func.func @transform_4(%arg0: i32) -> (i32, i32) {
    %c0_i32 = arith.constant 0 : i32
    %c0_i32_0 = arith.constant 0 : i32
    %c0_i32_1 = arith.constant 0 : i32
    return %c0_i32, %c0_i32_0 : i32, i32
  }
  func.func @transform_5(%arg0: i32) -> (i32, i32) {
    %c0_i32 = arith.constant 0 : i32
    %c0_i32_0 = arith.constant 0 : i32
    %c0_i32_1 = arith.constant 0 : i32
    return %c0_i32, %c0_i32_0 : i32, i32
  }
  func.func @transform_6(%arg0: i32) -> (i32, i32) {
    %c0_i32 = arith.constant 0 : i32
    %c0_i32_0 = arith.constant 0 : i32
    %c0_i32_1 = arith.constant 0 : i32
    return %c0_i32, %c0_i32_0 : i32, i32
  }
  func.func @transform_7(%arg0: i32) -> (i32, i32) {
    %c0_i32 = arith.constant 0 : i32
    %c0_i32_0 = arith.constant 0 : i32
    return %arg0, %c0_i32 : i32, i32
  }
}

</mosaic_0001>

<llo_original>
// kernel: aug_prediction_forward.1
$region0: #{aug_prediction_forward.1}
  #allocation0 [shape = 'u32[]', space=smem, size = 0x4, offset = 0x4, fixed_abs, tag = 'smem constant byte address 0x4 - core index']
  #allocation1 [shape = 'u32[144,128]{1,0:T(1,128)}', space=vmem, size = 0x12000, scoped, tag = 'internal scratch']
  %s0 = inlined_call_operand.vmem [shape: f32[8,32], index: 0, kind: input, shape index: {}]
  %s1 = inlined_call_operand.hbm [shape: f32[32,512], index: 1, kind: input, shape index: {}]
  %s2 = inlined_call_operand.vmem [shape: f32[1,512], index: 2, kind: input, shape index: {}]
  %s3 = inlined_call_operand.hbm [shape: f32[512,512], index: 3, kind: input, shape index: {}]
  %s4 = inlined_call_operand.vmem [shape: f32[1,512], index: 4, kind: input, shape index: {}]
  %s5 = inlined_call_operand.hbm [shape: f32[512,128], index: 5, kind: input, shape index: {}]
  %s6 = inlined_call_operand.vmem [shape: f32[1,128], index: 6, kind: input, shape index: {}]
  %s7 = inlined_call_operand.vmem [shape: f32[8,128], index: 7, kind: output, shape index: {}]
  %s8 = sld [smem:[#allocation0]]
  $region50: #{aug_prediction_forward.1} parent=0
    _
  %s10 = ssub.s32 1, %s8
  %s11 = scalar_select 0, %s10, %s8
  $region1: #{aug_prediction_forward.1} parent=0
    #allocation2 [shape = 'u8[65536]{0}', space=vmem, size = 0x10000, scoped, tag = 'input window, operand 1, single buffered']
    #allocation3 [shape = 's32[1]{0}', space=sflag, size = 0x4, scoped, tag = 'scoped memory for aug_prediction_forward.1']
    #allocation4 [shape = 'u8[1048576]{0}', space=vmem, size = 0x100000, scoped, tag = 'input window, operand 3, single buffered']
    #allocation5 [shape = 's32[1]{0}', space=sflag, size = 0x4, scoped, tag = 'scoped memory for aug_prediction_forward.1']
    #allocation6 [shape = 'u8[262144]{0}', space=vmem, size = 0x40000, scoped, tag = 'input window, operand 5, single buffered']
    %12 = vsyncpa [#allocation3], 0
    %13 = vsyncpa [#allocation5], 0
    // Predicated region
    $region2: #{aug_prediction_forward.1} parent=1 // pred_check
      _
    $region3: #{aug_prediction_forward.1} parent=1 // pred_check_branch
      %15 = sbr.rel (0) target = $region5
    $region4: #{aug_prediction_forward.1} parent=1 // pred_region
      _
    $region5: #{aug_prediction_forward.1} parent=1 // pred_fallthru
      _
    // Predicated region
    $region6: #{aug_prediction_forward.1} parent=1 // pred_check
      _
    $region7: #{aug_prediction_forward.1} parent=1 // pred_check_branch
      %17 = sbr.rel (0) target = $region9
    $region8: #{aug_prediction_forward.1} parent=1 // pred_region
      %s19 = ssub.s32 2048, 2048
      %20 = vsyncadd [#allocation3], %s19
      %s21 = sshll.u32 [#allocation2], 4
      %s22 = int_to_ptr.vmem [resolvable:$true] %s21
      %27 = dma.hbm_to_vmem [thread:$0]  %s1, 2048, %s22, [#allocation3], 512, 512, 32
    $region9: #{aug_prediction_forward.1} parent=1 // pred_fallthru
      _
    // Predicated region
    $region10: #{aug_prediction_forward.1} parent=1 // pred_check
      _
    $region11: #{aug_prediction_forward.1} parent=1 // pred_check_branch
      %29 = sbr.rel (0) target = $region13
    $region12: #{aug_prediction_forward.1} parent=1 // pred_region
      _
    $region13: #{aug_prediction_forward.1} parent=1 // pred_fallthru
      _
    // Predicated region
    $region14: #{aug_prediction_forward.1} parent=1 // pred_check
      _
    $region15: #{aug_prediction_forward.1} parent=1 // pred_check_branch
      %31 = sbr.rel (0) target = $region17
    $region16: #{aug_prediction_forward.1} parent=1 // pred_region
      %s33 = ssub.s32 32768, 32768
      %34 = vsyncadd [#allocation5], %s33
      %s35 = sshll.u32 [#allocation4], 4
      %s36 = int_to_ptr.vmem [resolvable:$true] %s35
      %41 = dma.hbm_to_vmem [thread:$0]  %s3, 32768, %s36, [#allocation5], 512, 512, 32
    $region17: #{aug_prediction_forward.1} parent=1 // pred_fallthru
      _
    // Predicated region
    $region18: #{aug_prediction_forward.1} parent=1 // pred_check
      _
    $region19: #{aug_prediction_forward.1} parent=1 // pred_check_branch
      %43 = sbr.rel (0) target = $region21
    $region20: #{aug_prediction_forward.1} parent=1 // pred_region
      _
    $region21: #{aug_prediction_forward.1} parent=1 // pred_fallthru
      _
    // Predicated region
    $region22: #{aug_prediction_forward.1} parent=1 // pred_check
      _
    $region23: #{aug_prediction_forward.1} parent=1 // pred_check_branch
      %45 = sbr.rel (0) target = $region25
    $region24: #{aug_prediction_forward.1} parent=1 // pred_region
      %s47 = ssub.s32 8192, 8192
      %48 = vsyncadd [#allocation5], %s47
      %s49 = sshll.u32 [#allocation6], 4
      %s50 = int_to_ptr.vmem [resolvable:$true] %s49
      %55 = dma.hbm_to_vmem [thread:$0]  %s5, 8192, %s50, [#allocation5], 128, 128, 8
    $region25: #{aug_prediction_forward.1} parent=1 // pred_fallthru
      _
    // Predicated region
    $region26: #{aug_prediction_forward.1} parent=1 // pred_check
      _
    $region27: #{aug_prediction_forward.1} parent=1 // pred_check_branch
      %57 = sbr.rel (0) target = $region29
    $region28: #{aug_prediction_forward.1} parent=1 // pred_region
      _
    $region29: #{aug_prediction_forward.1} parent=1 // pred_fallthru
      _
    // Predicated region
    $region30: #{aug_prediction_forward.1} parent=1 // pred_check
      _
    $region31: #{aug_prediction_forward.1} parent=1 // pred_check_branch
      %59 = sbr.rel (0) target = $region33
    $region32: #{aug_prediction_forward.1} parent=1 // pred_region
      %60 = dma.done [#allocation3], 2048
    $region33: #{aug_prediction_forward.1} parent=1 // pred_fallthru
      _
    // Predicated region
    $region34: #{aug_prediction_forward.1} parent=1 // pred_check
      _
    $region35: #{aug_prediction_forward.1} parent=1 // pred_check_branch
      %62 = sbr.rel (0) target = $region37
    $region36: #{aug_prediction_forward.1} parent=1 // pred_region
      %63 = dma.done [#allocation5], 32768
    $region37: #{aug_prediction_forward.1} parent=1 // pred_fallthru
      _
    // Predicated region
    $region38: #{aug_prediction_forward.1} parent=1 // pred_check
      _
    $region39: #{aug_prediction_forward.1} parent=1 // pred_check_branch
      %65 = sbr.rel (0) target = $region41
    $region40: #{aug_prediction_forward.1} parent=1 // pred_region
      %66 = dma.done [#allocation5], 8192
    $region41: #{aug_prediction_forward.1} parent=1 // pred_fallthru
      _
    %v67 = vld [vmem:[%s0] sm:$0xff]
    %v68 = vld [vmem:[#allocation2] sm:$0xff]
    %v69 = vld [vmem:[#allocation2 + $0x8] sm:$0xff]
    %v70 = vld [vmem:[#allocation2 + $0x10] sm:$0xff]
    %v71 = vld [vmem:[#allocation2 + $0x18] sm:$0xff]
    %v72 = vld [vmem:[#allocation2 + $0x20] sm:$0xff]
    %v73 = vld [vmem:[#allocation2 + $0x28] sm:$0xff]
    %v74 = vld [vmem:[#allocation2 + $0x30] sm:$0xff]
    %v75 = vld [vmem:[#allocation2 + $0x38] sm:$0xff]
    %v76 = vld [vmem:[#allocation2 + $0x40] sm:$0xff]
    %v77 = vld [vmem:[#allocation2 + $0x48] sm:$0xff]
    %v78 = vld [vmem:[#allocation2 + $0x50] sm:$0xff]
    %v79 = vld [vmem:[#allocation2 + $0x58] sm:$0xff]
    %v80 = vld [vmem:[#allocation2 + $0x60] sm:$0xff]
    %v81 = vld [vmem:[#allocation2 + $0x68] sm:$0xff]
    %v82 = vld [vmem:[#allocation2 + $0x70] sm:$0xff]
    %v83 = vld [vmem:[#allocation2 + $0x78] sm:$0xff]
    %v84 = vld [vmem:[%s2] sm:$0xf]
    %v86 = vlaneseq
    %v87 = vshrl.u32 %v86, 7
    %v88 = vsub.s32 0, %v87
    %v89 = vrot.slane %v84, %v88
    %v90 = vlaneseq
    %v91 = vshrl.u32 %v90, 7
    %v92 = vsub.s32 1, %v91
    %v93 = vrot.slane %v84, %v92
    %v94 = vlaneseq
    %v95 = vshrl.u32 %v94, 7
    %v96 = vsub.s32 2, %v95
    %v97 = vrot.slane %v84, %v96
    %v98 = vlaneseq
    %v99 = vshrl.u32 %v98, 7
    %v100 = vsub.s32 3, %v99
    %v101 = vrot.slane %v84, %v100
    %vm106 = vcmask 261120
    %v108 = vsel %vm106, %v67, 0
    %110 = vmatprep.subr.mxu0 %v69
    %111 = vmatpush1.msra.mxu0 %v68
    %112 = vmatprep.subr.mxu0 %v73
    %113 = vmatpush1.msra.mxu0 %v72
    %114 = vmatprep.subr.mxu0 %v77
    %115 = vmatpush1.msra.mxu0 %v76
    %116 = vmatprep.subr.mxu0 %v81
    %117 = vmatpush1.msra.mxu0 %v80
    %118 = vmatprep.subr.mxu0 0.0
    %119 = vmatpush1.msra.mxu0 0.0
    %120 = vmatprep.subr.mxu0 0.0
    %121 = vmatpush1.msra.mxu0 0.0
    %122 = vmatprep.subr.mxu0 0.0
    %123 = vmatpush1.msra.mxu0 0.0
    %124 = vmatprep.subr.mxu0 0.0
    %125 = vmatpush1.msra.mxu0 0.0
    %126 = vmatprep.subr.mxu0 0.0
    %127 = vmatpush1.msra.mxu0 0.0
    %128 = vmatprep.subr.mxu0 0.0
    %129 = vmatpush1.msra.mxu0 0.0
    %130 = vmatprep.subr.mxu0 0.0
    %131 = vmatpush1.msra.mxu0 0.0
    %132 = vmatprep.subr.mxu0 0.0
    %133 = vmatpush1.msra.mxu0 0.0
    %134 = vmatprep.subr.mxu0 0.0
    %135 = vmatpush1.msra.mxu0 0.0
    %136 = vmatprep.subr.mxu0 0.0
    %137 = vmatpush1.msra.mxu0 0.0
    %138 = vmatprep.subr.mxu0 0.0
    %139 = vmatpush1.msra.mxu0 0.0
    %140 = vmatprep.subr.mxu0 0.0
    %141 = vmatpush1.msra.mxu0 0.0
    %142 = vmatprep.subr.mxu0 0.0
    %143 = vmatpush1.msra.mxu0 0.0
    %144 = vmatprep.subr.mxu0 0.0
    %145 = vmatpush1.msra.mxu0 0.0
    %146 = vmatprep.subr.mxu0 0.0
    %147 = vmatpush1.msra.mxu0 0.0
    %148 = vmatprep.subr.mxu0 0.0
    %149 = vmatpush1.msra.mxu0 0.0
    %150 = vmatprep.subr.mxu0 0.0
    %151 = vmatpush1.msra.mxu0 0.0
    %152 = vmatprep.subr.mxu0 0.0
    %153 = vmatpush1.msra.mxu0 0.0
    %154 = vmatprep.subr.mxu0 0.0
    %155 = vmatpush1.msra.mxu0 0.0
    %156 = vmatprep.subr.mxu0 0.0
    %157 = vmatpush1.msra.mxu0 0.0
    %158 = vmatprep.subr.mxu0 0.0
    %159 = vmatpush1.msra.mxu0 0.0
    %160 = vmatprep.subr.mxu0 0.0
    %161 = vmatpush1.msra.mxu0 0.0
    %162 = vmatprep.subr.mxu0 0.0
    %163 = vmatpush1.msra.mxu0 0.0
    %164 = vmatprep.subr.mxu0 0.0
    %165 = vmatpush1.msra.mxu0 0.0
    %166 = vmatprep.subr.mxu0 0.0
    %167 = vmatpush1.msra.mxu0 0.0
    %168 = vmatprep.subr.mxu0 0.0
    %169 = vmatpush1.msra.mxu0 0.0
    %170 = vmatprep.subr.mxu0 0.0
    %171 = vmatpush1.msra.mxu0 0.0
    %172 = vmatprep.subr.mxu0 0.0
    %173 = vmatpush1.msra.mxu0 0.0
    %174 = vmatprep.mubr.f32.mxu0 0.0
    %175 = vmatmul.mubr.f32.gmra.mrb[0].mxu0 %v108
    %v176 = vpop.f32.mrb[0].mxu0
    %v177 = vadd.f32 %v89, %v176
    %v178 = vpop.f32.mrb[0].mxu0
    %v179 = vadd.f32 %v93, %v178
    %180 = vdwg.mxu0
    %181 = vmatprep.subr.mxu0 %v71
    %182 = vmatpush1.msra.mxu0 %v70
    %183 = vmatprep.subr.mxu0 %v75
    %184 = vmatpush1.msra.mxu0 %v74
    %185 = vmatprep.subr.mxu0 %v79
    %186 = vmatpush1.msra.mxu0 %v78
    %187 = vmatprep.subr.mxu0 %v83
    %188 = vmatpush1.msra.mxu0 %v82
    %189 = vmatprep.subr.mxu0 0.0
    %190 = vmatpush1.msra.mxu0 0.0
    %191 = vmatprep.subr.mxu0 0.0
    %192 = vmatpush1.msra.mxu0 0.0
    %193 = vmatprep.subr.mxu0 0.0
    %194 = vmatpush1.msra.mxu0 0.0
    %195 = vmatprep.subr.mxu0 0.0
    %196 = vmatpush1.msra.mxu0 0.0
    %197 = vmatprep.subr.mxu0 0.0
    %198 = vmatpush1.msra.mxu0 0.0
    %199 = vmatprep.subr.mxu0 0.0
    %200 = vmatpush1.msra.mxu0 0.0
    %201 = vmatprep.subr.mxu0 0.0
    %202 = vmatpush1.msra.mxu0 0.0
    %203 = vmatprep.subr.mxu0 0.0
    %204 = vmatpush1.msra.mxu0 0.0
    %205 = vmatprep.subr.mxu0 0.0
    %206 = vmatpush1.msra.mxu0 0.0
    %207 = vmatprep.subr.mxu0 0.0
    %208 = vmatpush1.msra.mxu0 0.0
    %209 = vmatprep.subr.mxu0 0.0
    %210 = vmatpush1.msra.mxu0 0.0
    %211 = vmatprep.subr.mxu0 0.0
    %212 = vmatpush1.msra.mxu0 0.0
    %213 = vmatprep.subr.mxu0 0.0
    %214 = vmatpush1.msra.mxu0 0.0
    %215 = vmatprep.subr.mxu0 0.0
    %216 = vmatpush1.msra.mxu0 0.0
    %217 = vmatprep.subr.mxu0 0.0
    %218 = vmatpush1.msra.mxu0 0.0
    %219 = vmatprep.subr.mxu0 0.0
    %220 = vmatpush1.msra.mxu0 0.0
    %221 = vmatprep.subr.mxu0 0.0
    %222 = vmatpush1.msra.mxu0 0.0
    %223 = vmatprep.subr.mxu0 0.0
    %224 = vmatpush1.msra.mxu0 0.0
    %225 = vmatprep.subr.mxu0 0.0
    %226 = vmatpush1.msra.mxu0 0.0
    %227 = vmatprep.subr.mxu0 0.0
    %228 = vmatpush1.msra.mxu0 0.0
    %229 = vmatprep.subr.mxu0 0.0
    %230 = vmatpush1.msra.mxu0 0.0
    %231 = vmatprep.subr.mxu0 0.0
    %232 = vmatpush1.msra.mxu0 0.0
    %233 = vmatprep.subr.mxu0 0.0
    %234 = vmatpush1.msra.mxu0 0.0
    %235 = vmatprep.subr.mxu0 0.0
    %236 = vmatpush1.msra.mxu0 0.0
    %237 = vmatprep.subr.mxu0 0.0
    %238 = vmatpush1.msra.mxu0 0.0
    %239 = vmatprep.subr.mxu0 0.0
    %240 = vmatpush1.msra.mxu0 0.0
    %241 = vmatprep.subr.mxu0 0.0
    %242 = vmatpush1.msra.mxu0 0.0
    %243 = vmatprep.subr.mxu0 0.0
    %244 = vmatpush1.msra.mxu0 0.0
    %245 = vmatprep.mubr.f32.mxu0 0.0
    %246 = vmatmul.mubr.f32.gmra.mrb[0].mxu0 %v108
    %v247 = vpop.f32.mrb[0].mxu0
    %v248 = vadd.f32 %v97, %v247
    %v249 = vpop.f32.mrb[0].mxu0
    %v250 = vadd.f32 %v101, %v249
    %251 = vdwg.mxu0
    %v252 = vmax.f32 %v177, 0.0
    %v253 = vmax.f32 %v179, 0.0
    %v254 = vmax.f32 %v248, 0.0
    %v255 = vmax.f32 %v250, 0.0
    %v256 = vld [vmem:[#allocation4] sm:$0xff]
    %v257 = vld [vmem:[#allocation4 + $0x8] sm:$0xff]
    %v258 = vld [vmem:[#allocation4 + $0x10] sm:$0xff]
    %v259 = vld [vmem:[#allocation4 + $0x18] sm:$0xff]
    %v260 = vld [vmem:[#allocation4 + $0x20] sm:$0xff]
    %v261 = vld [vmem:[#allocation4 + $0x28] sm:$0xff]
    %v262 = vld [vmem:[#allocation4 + $0x30] sm:$0xff]
    %v263 = vld [vmem:[#allocation4 + $0x38] sm:$0xff]
    %v264 = vld [vmem:[#allocation4 + $0x40] sm:$0xff]
    %v265 = vld [vmem:[#allocation4 + $0x48] sm:$0xff]
    %v266 = vld [vmem:[#allocation4 + $0x50] sm:$0xff]
    %v267 = vld [vmem:[#allocation4 + $0x58] sm:$0xff]
    %v268 = vld [vmem:[#allocation4 + $0x60] sm:$0xff]
    %v269 = vld [vmem:[#allocation4 + $0x68] sm:$0xff]
    %v270 = vld [vmem:[#allocation4 + $0x70] sm:$0xff]
    %v271 = vld [vmem:[#allocation4 + $0x78] sm:$0xff]
    %v272 = vld [vmem:[#allocation4 + $0x80] sm:$0xff]
    %v273 = vld [vmem:[#allocation4 + $0x88] sm:$0xff]
    %v274 = vld [vmem:[#allocation4 + $0x90] sm:$0xff]
    %v275 = vld [vmem:[#allocation4 + $0x98] sm:$0xff]
    %v276 = vld [vmem:[#allocation4 + $0xa0] sm:$0xff]
    %v277 = vld [vmem:[#allocation4 + $0xa8] sm:$0xff]
    %v278 = vld [vmem:[#allocation4 + $0xb0] sm:$0xff]
    %v279 = vld [vmem:[#allocation4 + $0xb8] sm:$0xff]
    %v280 = vld [vmem:[#allocation4 + $0xc0] sm:$0xff]
    %v281 = vld [vmem:[#allocation4 + $0xc8] sm:$0xff]
    %v282 = vld [vmem:[#allocation4 + $0xd0] sm:$0xff]
    %v283 = vld [vmem:[#allocation4 + $0xd8] sm:$0xff]
    %v284 = vld [vmem:[#allocation4 + $0xe0] sm:$0xff]
    %v285 = vld [vmem:[#allocation4 + $0xe8] sm:$0xff]
    %v286 = vld [vmem:[#allocation4 + $0xf0] sm:$0xff]
    %v287 = vld [vmem:[#allocation4 + $0xf8] sm:$0xff]
    %v288 = vld [vmem:[#allocation4 + $0x100] sm:$0xff]
    %v289 = vld [vmem:[#allocation4 + $0x108] sm:$0xff]
    %v290 = vld [vmem:[#allocation4 + $0x110] sm:$0xff]
    %v291 = vld [vmem:[#allocation4 + $0x118] sm:$0xff]
    %v292 = vld [vmem:[#allocation4 + $0x120] sm:$0xff]
    %v293 = vld [vmem:[#allocation4 + $0x128] sm:$0xff]
    %v294 = vld [vmem:[#allocation4 + $0x130] sm:$0xff]
    %v295 = vld [vmem:[#allocation4 + $0x138] sm:$0xff]
    %v296 = vld [vmem:[#allocation4 + $0x140] sm:$0xff]
    %v297 = vld [vmem:[#allocation4 + $0x148] sm:$0xff]
    %v298 = vld [vmem:[#allocation4 + $0x150] sm:$0xff]
    %v299 = vld [vmem:[#allocation4 + $0x158] sm:$0xff]
    %v300 = vld [vmem:[#allocation4 + $0x160] sm:$0xff]
    %v301 = vld [vmem:[#allocation4 + $0x168] sm:$0xff]
    %v302 = vld [vmem:[#allocation4 + $0x170] sm:$0xff]
    %v303 = vld [vmem:[#allocation4 + $0x178] sm:$0xff]
    %v304 = vld [vmem:[#allocation4 + $0x180] sm:$0xff]
    %v305 = vld [vmem:[#allocation4 + $0x188] sm:$0xff]
    %v306 = vld [vmem:[#allocation4 + $0x190] sm:$0xff]
    %v307 = vld [vmem:[#allocation4 + $0x198] sm:$0xff]
    %v308 = vld [vmem:[#allocation4 + $0x1a0] sm:$0xff]
    %v309 = vld [vmem:[#allocation4 + $0x1a8] sm:$0xff]
    %v310 = vld [vmem:[#allocation4 + $0x1b0] sm:$0xff]
    %v311 = vld [vmem:[#allocation4 + $0x1b8] sm:$0xff]
    %v312 = vld [vmem:[#allocation4 + $0x1c0] sm:$0xff]
    %v313 = vld [vmem:[#allocation4 + $0x1c8] sm:$0xff]
    %v314 = vld [vmem:[#allocation4 + $0x1d0] sm:$0xff]
    %v315 = vld [vmem:[#allocation4 + $0x1d8] sm:$0xff]
    %v316 = vld [vmem:[#allocation4 + $0x1e0] sm:$0xff]
    %v317 = vld [vmem:[#allocation4 + $0x1e8] sm:$0xff]
    %v318 = vld [vmem:[#allocation4 + $0x1f0] sm:$0xff]
    %v319 = vld [vmem:[#allocation4 + $0x1f8] sm:$0xff]
    %v320 = vld [vmem:[#allocation4 + $0x200] sm:$0xff]
    %v321 = vld [vmem:[#allocation4 + $0x208] sm:$0xff]
    %v322 = vld [vmem:[#allocation4 + $0x210] sm:$0xff]
    %v323 = vld [vmem:[#allocation4 + $0x218] sm:$0xff]
    %v324 = vld [vmem:[#allocation4 + $0x220] sm:$0xff]
    %v325 = vld [vmem:[#allocation4 + $0x228] sm:$0xff]
    %v326 = vld [vmem:[#allocation4 + $0x230] sm:$0xff]
    %v327 = vld [vmem:[#allocation4 + $0x238] sm:$0xff]
    %v328 = vld [vmem:[#allocation4 + $0x240] sm:$0xff]
    %v329 = vld [vmem:[#allocation4 + $0x248] sm:$0xff]
    %v330 = vld [vmem:[#allocation4 + $0x250] sm:$0xff]
    %v331 = vld [vmem:[#allocation4 + $0x258] sm:$0xff]
    %v332 = vld [vmem:[#allocation4 + $0x260] sm:$0xff]
    %v333 = vld [vmem:[#allocation4 + $0x268] sm:$0xff]
    %v334 = vld [vmem:[#allocation4 + $0x270] sm:$0xff]
    %v335 = vld [vmem:[#allocation4 + $0x278] sm:$0xff]
    %v336 = vld [vmem:[#allocation4 + $0x280] sm:$0xff]
    %v337 = vld [vmem:[#allocation4 + $0x288] sm:$0xff]
    %v338 = vld [vmem:[#allocation4 + $0x290] sm:$0xff]
    %v339 = vld [vmem:[#allocation4 + $0x298] sm:$0xff]
    %v340 = vld [vmem:[#allocation4 + $0x2a0] sm:$0xff]
    %v341 = vld [vmem:[#allocation4 + $0x2a8] sm:$0xff]
    %v342 = vld [vmem:[#allocation4 + $0x2b0] sm:$0xff]
    %v343 = vld [vmem:[#allocation4 + $0x2b8] sm:$0xff]
    %v344 = vld [vmem:[#allocation4 + $0x2c0] sm:$0xff]
    %v345 = vld [vmem:[#allocation4 + $0x2c8] sm:$0xff]
    %v346 = vld [vmem:[#allocation4 + $0x2d0] sm:$0xff]
    %v347 = vld [vmem:[#allocation4 + $0x2d8] sm:$0xff]
    %v348 = vld [vmem:[#allocation4 + $0x2e0] sm:$0xff]
    %v349 = vld [vmem:[#allocation4 + $0x2e8] sm:$0xff]
    %v350 = vld [vmem:[#allocation4 + $0x2f0] sm:$0xff]
    %v351 = vld [vmem:[#allocation4 + $0x2f8] sm:$0xff]
    %v352 = vld [vmem:[#allocation4 + $0x300] sm:$0xff]
    %v353 = vld [vmem:[#allocation4 + $0x308] sm:$0xff]
    %v354 = vld [vmem:[#allocation4 + $0x310] sm:$0xff]
    %v355 = vld [vmem:[#allocation4 + $0x318] sm:$0xff]
    %v356 = vld [vmem:[#allocation4 + $0x320] sm:$0xff]
    %v357 = vld [vmem:[#allocation4 + $0x328] sm:$0xff]
    %v358 = vld [vmem:[#allocation4 + $0x330] sm:$0xff]
    %v359 = vld [vmem:[#allocation4 + $0x338] sm:$0xff]
    %v360 = vld [vmem:[#allocation4 + $0x340] sm:$0xff]
    %v361 = vld [vmem:[#allocation4 + $0x348] sm:$0xff]
    %v362 = vld [vmem:[#allocation4 + $0x350] sm:$0xff]
    %v363 = vld [vmem:[#allocation4 + $0x358] sm:$0xff]
    %v364 = vld [vmem:[#allocation4 + $0x360] sm:$0xff]
    %v365 = vld [vmem:[#allocation4 + $0x368] sm:$0xff]
    %v366 = vld [vmem:[#allocation4 + $0x370] sm:$0xff]
    %v367 = vld [vmem:[#allocation4 + $0x378] sm:$0xff]
    %v368 = vld [vmem:[#allocation4 + $0x380] sm:$0xff]
    %v369 = vld [vmem:[#allocation4 + $0x388] sm:$0xff]
    %v370 = vld [vmem:[#allocation4 + $0x390] sm:$0xff]
    %v371 = vld [vmem:[#allocation4 + $0x398] sm:$0xff]
    %v372 = vld [vmem:[#allocation4 + $0x3a0] sm:$0xff]
    %v373 = vld [vmem:[#allocation4 + $0x3a8] sm:$0xff]
    %v374 = vld [vmem:[#allocation4 + $0x3b0] sm:$0xff]
    %v375 = vld [vmem:[#allocation4 + $0x3b8] sm:$0xff]
    %v376 = vld [vmem:[#allocation4 + $0x3c0] sm:$0xff]
    %v377 = vld [vmem:[#allocation4 + $0x3c8] sm:$0xff]
    %v378 = vld [vmem:[#allocation4 + $0x3d0] sm:$0xff]
    %v379 = vld [vmem:[#allocation4 + $0x3d8] sm:$0xff]
    %v380 = vld [vmem:[#allocation4 + $0x3e0] sm:$0xff]
    %v381 = vld [vmem:[#allocation4 + $0x3e8] sm:$0xff]
    %v382 = vld [vmem:[#allocation4 + $0x3f0] sm:$0xff]
    %v383 = vld [vmem:[#allocation4 + $0x3f8] sm:$0xff]
    %v384 = vld [vmem:[#allocation4 + $0x400] sm:$0xff]
    %v385 = vld [vmem:[#allocation4 + $0x408] sm:$0xff]
    %v386 = vld [vmem:[#allocation4 + $0x410] sm:$0xff]
    %v387 = vld [vmem:[#allocation4 + $0x418] sm:$0xff]
    %v388 = vld [vmem:[#allocation4 + $0x420] sm:$0xff]
    %v389 = vld [vmem:[#allocation4 + $0x428] sm:$0xff]
    %v390 = vld [vmem:[#allocation4 + $0x430] sm:$0xff]
    %v391 = vld [vmem:[#allocation4 + $0x438] sm:$0xff]
    %v392 = vld [vmem:[#allocation4 + $0x440] sm:$0xff]
    %v393 = vld [vmem:[#allocation4 + $0x448] sm:$0xff]
    %v394 = vld [vmem:[#allocation4 + $0x450] sm:$0xff]
    %v395 = vld [vmem:[#allocation4 + $0x458] sm:$0xff]
    %v396 = vld [vmem:[#allocation4 + $0x460] sm:$0xff]
    %v397 = vld [vmem:[#allocation4 + $0x468] sm:$0xff]
    %v398 = vld [vmem:[#allocation4 + $0x470] sm:$0xff]
    %v399 = vld [vmem:[#allocation4 + $0x478] sm:$0xff]
    %v400 = vld [vmem:[#allocation4 + $0x480] sm:$0xff]
    %v401 = vld [vmem:[#allocation4 + $0x488] sm:$0xff]
    %v402 = vld [vmem:[#allocation4 + $0x490] sm:$0xff]
    %v403 = vld [vmem:[#allocation4 + $0x498] sm:$0xff]
    %v404 = vld [vmem:[#allocation4 + $0x4a0] sm:$0xff]
    %v405 = vld [vmem:[#allocation4 + $0x4a8] sm:$0xff]
    %v406 = vld [vmem:[#allocation4 + $0x4b0] sm:$0xff]
    %v407 = vld [vmem:[#allocation4 + $0x4b8] sm:$0xff]
    %v408 = vld [vmem:[#allocation4 + $0x4c0] sm:$0xff]
    %v409 = vld [vmem:[#allocation4 + $0x4c8] sm:$0xff]
    %v410 = vld [vmem:[#allocation4 + $0x4d0] sm:$0xff]
    %v411 = vld [vmem:[#allocation4 + $0x4d8] sm:$0xff]
    %v412 = vld [vmem:[#allocation4 + $0x4e0] sm:$0xff]
    %v413 = vld [vmem:[#allocation4 + $0x4e8] sm:$0xff]
    %v414 = vld [vmem:[#allocation4 + $0x4f0] sm:$0xff]
    %v415 = vld [vmem:[#allocation4 + $0x4f8] sm:$0xff]
    %v416 = vld [vmem:[#allocation4 + $0x500] sm:$0xff]
    %v417 = vld [vmem:[#allocation4 + $0x508] sm:$0xff]
    %v418 = vld [vmem:[#allocation4 + $0x510] sm:$0xff]
    %v419 = vld [vmem:[#allocation4 + $0x518] sm:$0xff]
    %v420 = vld [vmem:[#allocation4 + $0x520] sm:$0xff]
    %v421 = vld [vmem:[#allocation4 + $0x528] sm:$0xff]
    %v422 = vld [vmem:[#allocation4 + $0x530] sm:$0xff]
    %v423 = vld [vmem:[#allocation4 + $0x538] sm:$0xff]
    %v424 = vld [vmem:[#allocation4 + $0x540] sm:$0xff]
    %v425 = vld [vmem:[#allocation4 + $0x548] sm:$0xff]
    %v426 = vld [vmem:[#allocation4 + $0x550] sm:$0xff]
    %v427 = vld [vmem:[#allocation4 + $0x558] sm:$0xff]
    %v428 = vld [vmem:[#allocation4 + $0x560] sm:$0xff]
    %v429 = vld [vmem:[#allocation4 + $0x568] sm:$0xff]
    %v430 = vld [vmem:[#allocation4 + $0x570] sm:$0xff]
    %v431 = vld [vmem:[#allocation4 + $0x578] sm:$0xff]
    %v432 = vld [vmem:[#allocation4 + $0x580] sm:$0xff]
    %v433 = vld [vmem:[#allocation4 + $0x588] sm:$0xff]
    %v434 = vld [vmem:[#allocation4 + $0x590] sm:$0xff]
    %v435 = vld [vmem:[#allocation4 + $0x598] sm:$0xff]
    %v436 = vld [vmem:[#allocation4 + $0x5a0] sm:$0xff]
    %v437 = vld [vmem:[#allocation4 + $0x5a8] sm:$0xff]
    %v438 = vld [vmem:[#allocation4 + $0x5b0] sm:$0xff]
    %v439 = vld [vmem:[#allocation4 + $0x5b8] sm:$0xff]
    %v440 = vld [vmem:[#allocation4 + $0x5c0] sm:$0xff]
    %v441 = vld [vmem:[#allocation4 + $0x5c8] sm:$0xff]
    %v442 = vld [vmem:[#allocation4 + $0x5d0] sm:$0xff]
    %v443 = vld [vmem:[#allocation4 + $0x5d8] sm:$0xff]
    %v444 = vld [vmem:[#allocation4 + $0x5e0] sm:$0xff]
    %v445 = vld [vmem:[#allocation4 + $0x5e8] sm:$0xff]
    %v446 = vld [vmem:[#allocation4 + $0x5f0] sm:$0xff]
    %v447 = vld [vmem:[#allocation4 + $0x5f8] sm:$0xff]
    %v448 = vld [vmem:[#allocation4 + $0x600] sm:$0xff]
    %v449 = vld [vmem:[#allocation4 + $0x608] sm:$0xff]
    %v450 = vld [vmem:[#allocation4 + $0x610] sm:$0xff]
    %v451 = vld [vmem:[#allocation4 + $0x618] sm:$0xff]
    %v452 = vld [vmem:[#allocation4 + $0x620] sm:$0xff]
    %v453 = vld [vmem:[#allocation4 + $0x628] sm:$0xff]
    %v454 = vld [vmem:[#allocation4 + $0x630] sm:$0xff]
    %v455 = vld [vmem:[#allocation4 + $0x638] sm:$0xff]
    %v456 = vld [vmem:[#allocation4 + $0x640] sm:$0xff]
    %v457 = vld [vmem:[#allocation4 + $0x648] sm:$0xff]
    %v458 = vld [vmem:[#allocation4 + $0x650] sm:$0xff]
    %v459 = vld [vmem:[#allocation4 + $0x658] sm:$0xff]
    %v460 = vld [vmem:[#allocation4 + $0x660] sm:$0xff]
    %v461 = vld [vmem:[#allocation4 + $0x668] sm:$0xff]
    %v462 = vld [vmem:[#allocation4 + $0x670] sm:$0xff]
    %v463 = vld [vmem:[#allocation4 + $0x678] sm:$0xff]
    %v464 = vld [vmem:[#allocation4 + $0x680] sm:$0xff]
    %v465 = vld [vmem:[#allocation4 + $0x688] sm:$0xff]
    %v466 = vld [vmem:[#allocation4 + $0x690] sm:$0xff]
    %v467 = vld [vmem:[#allocation4 + $0x698] sm:$0xff]
    %v468 = vld [vmem:[#allocation4 + $0x6a0] sm:$0xff]
    %v469 = vld [vmem:[#allocation4 + $0x6a8] sm:$0xff]
    %v470 = vld [vmem:[#allocation4 + $0x6b0] sm:$0xff]
    %v471 = vld [vmem:[#allocation4 + $0x6b8] sm:$0xff]
    %v472 = vld [vmem:[#allocation4 + $0x6c0] sm:$0xff]
    %v473 = vld [vmem:[#allocation4 + $0x6c8] sm:$0xff]
    %v474 = vld [vmem:[#allocation4 + $0x6d0] sm:$0xff]
    %v475 = vld [vmem:[#allocation4 + $0x6d8] sm:$0xff]
    %v476 = vld [vmem:[#allocation4 + $0x6e0] sm:$0xff]
    %v477 = vld [vmem:[#allocation4 + $0x6e8] sm:$0xff]
    %v478 = vld [vmem:[#allocation4 + $0x6f0] sm:$0xff]
    %v479 = vld [vmem:[#allocation4 + $0x6f8] sm:$0xff]
    %v480 = vld [vmem:[#allocation4 + $0x700] sm:$0xff]
    %v481 = vld [vmem:[#allocation4 + $0x708] sm:$0xff]
    %v482 = vld [vmem:[#allocation4 + $0x710] sm:$0xff]
    %v483 = vld [vmem:[#allocation4 + $0x718] sm:$0xff]
    %v484 = vld [vmem:[#allocation4 + $0x720] sm:$0xff]
    %v485 = vld [vmem:[#allocation4 + $0x728] sm:$0xff]
    %v486 = vld [vmem:[#allocation4 + $0x730] sm:$0xff]
    %v487 = vld [vmem:[#allocation4 + $0x738] sm:$0xff]
    %v488 = vld [vmem:[#allocation4 + $0x740] sm:$0xff]
    %v489 = vld [vmem:[#allocation4 + $0x748] sm:$0xff]
    %v490 = vld [vmem:[#allocation4 + $0x750] sm:$0xff]
    %v491 = vld [vmem:[#allocation4 + $0x758] sm:$0xff]
    %v492 = vld [vmem:[#allocation4 + $0x760] sm:$0xff]
    %v493 = vld [vmem:[#allocation4 + $0x768] sm:$0xff]
    %v494 = vld [vmem:[#allocation4 + $0x770] sm:$0xff]
    %v495 = vld [vmem:[#allocation4 + $0x778] sm:$0xff]
    %v496 = vld [vmem:[#allocation4 + $0x780] sm:$0xff]
    %v497 = vld [vmem:[#allocation4 + $0x788] sm:$0xff]
    %v498 = vld [vmem:[#allocation4 + $0x790] sm:$0xff]
    %v499 = vld [vmem:[#allocation4 + $0x798] sm:$0xff]
    %v500 = vld [vmem:[#allocation4 + $0x7a0] sm:$0xff]
    %v501 = vld [vmem:[#allocation4 + $0x7a8] sm:$0xff]
    %v502 = vld [vmem:[#allocation4 + $0x7b0] sm:$0xff]
    %v503 = vld [vmem:[#allocation4 + $0x7b8] sm:$0xff]
    %v504 = vld [vmem:[#allocation4 + $0x7c0] sm:$0xff]
    %v505 = vld [vmem:[#allocation4 + $0x7c8] sm:$0xff]
    %v506 = vld [vmem:[#allocation4 + $0x7d0] sm:$0xff]
    %v507 = vld [vmem:[#allocation4 + $0x7d8] sm:$0xff]
    %v508 = vld [vmem:[#allocation4 + $0x7e0] sm:$0xff]
    %v509 = vld [vmem:[#allocation4 + $0x7e8] sm:$0xff]
    %v510 = vld [vmem:[#allocation4 + $0x7f0] sm:$0xff]
    %v511 = vld [vmem:[#allocation4 + $0x7f8] sm:$0xff]
    %v512 = vld [vmem:[%s4] sm:$0xf]
    %v514 = vlaneseq
    %v515 = vshrl.u32 %v514, 7
    %v516 = vsub.s32 0, %v515
    %v517 = vrot.slane %v512, %v516
    %v518 = vlaneseq
    %v519 = vshrl.u32 %v518, 7
    %v520 = vsub.s32 1, %v519
    %v521 = vrot.slane %v512, %v520
    %v522 = vlaneseq
    %v523 = vshrl.u32 %v522, 7
    %v524 = vsub.s32 2, %v523
    %v525 = vrot.slane %v512, %v524
    %v526 = vlaneseq
    %v527 = vshrl.u32 %v526, 7
    %v528 = vsub.s32 3, %v527
    %v529 = vrot.slane %v512, %v528
    %534 = vmatprep.subr.mxu0 %v257
    %535 = vmatpush1.msra.mxu0 %v256
    %536 = vmatprep.subr.mxu0 %v261
    %537 = vmatpush1.msra.mxu0 %v260
    %538 = vmatprep.subr.mxu0 %v265
    %539 = vmatpush1.msra.mxu0 %v264
    %540 = vmatprep.subr.mxu0 %v269
    %541 = vmatpush1.msra.mxu0 %v268
    %542 = vmatprep.subr.mxu0 %v273
    %543 = vmatpush1.msra.mxu0 %v272
    %544 = vmatprep.subr.mxu0 %v277
    %545 = vmatpush1.msra.mxu0 %v276
    %546 = vmatprep.subr.mxu0 %v281
    %547 = vmatpush1.msra.mxu0 %v280
    %548 = vmatprep.subr.mxu0 %v285
    %549 = vmatpush1.msra.mxu0 %v284
    %550 = vmatprep.subr.mxu0 %v289
    %551 = vmatpush1.msra.mxu0 %v288
    %552 = vmatprep.subr.mxu0 %v293
    %553 = vmatpush1.msra.mxu0 %v292
    %554 = vmatprep.subr.mxu0 %v297
    %555 = vmatpush1.msra.mxu0 %v296
    %556 = vmatprep.subr.mxu0 %v301
    %557 = vmatpush1.msra.mxu0 %v300
    %558 = vmatprep.subr.mxu0 %v305
    %559 = vmatpush1.msra.mxu0 %v304
    %560 = vmatprep.subr.mxu0 %v309
    %561 = vmatpush1.msra.mxu0 %v308
    %562 = vmatprep.subr.mxu0 %v313
    %563 = vmatpush1.msra.mxu0 %v312
    %564 = vmatprep.subr.mxu0 %v317
    %565 = vmatpush1.msra.mxu0 %v316
    %566 = vmatprep.subr.mxu0 %v321
    %567 = vmatpush1.msra.mxu0 %v320
    %568 = vmatprep.subr.mxu0 %v325
    %569 = vmatpush1.msra.mxu0 %v324
    %570 = vmatprep.subr.mxu0 %v329
    %571 = vmatpush1.msra.mxu0 %v328
    %572 = vmatprep.subr.mxu0 %v333
    %573 = vmatpush1.msra.mxu0 %v332
    %574 = vmatprep.subr.mxu0 %v337
    %575 = vmatpush1.msra.mxu0 %v336
    %576 = vmatprep.subr.mxu0 %v341
    %577 = vmatpush1.msra.mxu0 %v340
    %578 = vmatprep.subr.mxu0 %v345
    %579 = vmatpush1.msra.mxu0 %v344
    %580 = vmatprep.subr.mxu0 %v349
    %581 = vmatpush1.msra.mxu0 %v348
    %582 = vmatprep.subr.mxu0 %v353
    %583 = vmatpush1.msra.mxu0 %v352
    %584 = vmatprep.subr.mxu0 %v357
    %585 = vmatpush1.msra.mxu0 %v356
    %586 = vmatprep.subr.mxu0 %v361
    %587 = vmatpush1.msra.mxu0 %v360
    %588 = vmatprep.subr.mxu0 %v365
    %589 = vmatpush1.msra.mxu0 %v364
    %590 = vmatprep.subr.mxu0 %v369
    %591 = vmatpush1.msra.mxu0 %v368
    %592 = vmatprep.subr.mxu0 %v373
    %593 = vmatpush1.msra.mxu0 %v372
    %594 = vmatprep.subr.mxu0 %v377
    %595 = vmatpush1.msra.mxu0 %v376
    %596 = vmatprep.subr.mxu0 %v381
    %597 = vmatpush1.msra.mxu0 %v380
    %598 = vmatprep.mubr.f32.mxu0 %v253
    %599 = vmatmul.mubr.f32.gmra.mrb[0].mxu0 %v252
    %v600 = vpop.f32.mrb[0].mxu0
    %v601 = vadd.f32 %v517, %v600
    %v602 = vpop.f32.mrb[0].mxu0
    %v603 = vadd.f32 %v521, %v602
    %604 = vdwg.mxu0
    %605 = vmatprep.subr.mxu0 %v385
    %606 = vmatpush1.msra.mxu0 %v384
    %607 = vmatprep.subr.mxu0 %v389
    %608 = vmatpush1.msra.mxu0 %v388
    %609 = vmatprep.subr.mxu0 %v393
    %610 = vmatpush1.msra.mxu0 %v392
    %611 = vmatprep.subr.mxu0 %v397
    %612 = vmatpush1.msra.mxu0 %v396
    %613 = vmatprep.subr.mxu0 %v401
    %614 = vmatpush1.msra.mxu0 %v400
    %615 = vmatprep.subr.mxu0 %v405
    %616 = vmatpush1.msra.mxu0 %v404
    %617 = vmatprep.subr.mxu0 %v409
    %618 = vmatpush1.msra.mxu0 %v408
    %619 = vmatprep.subr.mxu0 %v413
    %620 = vmatpush1.msra.mxu0 %v412
    %621 = vmatprep.subr.mxu0 %v417
    %622 = vmatpush1.msra.mxu0 %v416
    %623 = vmatprep.subr.mxu0 %v421
    %624 = vmatpush1.msra.mxu0 %v420
    %625 = vmatprep.subr.mxu0 %v425
    %626 = vmatpush1.msra.mxu0 %v424
    %627 = vmatprep.subr.mxu0 %v429
    %628 = vmatpush1.msra.mxu0 %v428
    %629 = vmatprep.subr.mxu0 %v433
    %630 = vmatpush1.msra.mxu0 %v432
    %631 = vmatprep.subr.mxu0 %v437
    %632 = vmatpush1.msra.mxu0 %v436
    %633 = vmatprep.subr.mxu0 %v441
    %634 = vmatpush1.msra.mxu0 %v440
    %635 = vmatprep.subr.mxu0 %v445
    %636 = vmatpush1.msra.mxu0 %v444
    %637 = vmatprep.subr.mxu0 %v449
    %638 = vmatpush1.msra.mxu0 %v448
    %639 = vmatprep.subr.mxu0 %v453
    %640 = vmatpush1.msra.mxu0 %v452
    %641 = vmatprep.subr.mxu0 %v457
    %642 = vmatpush1.msra.mxu0 %v456
    %643 = vmatprep.subr.mxu0 %v461
    %644 = vmatpush1.msra.mxu0 %v460
    %645 = vmatprep.subr.mxu0 %v465
    %646 = vmatpush1.msra.mxu0 %v464
    %647 = vmatprep.subr.mxu0 %v469
    %648 = vmatpush1.msra.mxu0 %v468
    %649 = vmatprep.subr.mxu0 %v473
    %650 = vmatpush1.msra.mxu0 %v472
    %651 = vmatprep.subr.mxu0 %v477
    %652 = vmatpush1.msra.mxu0 %v476
    %653 = vmatprep.subr.mxu0 %v481
    %654 = vmatpush1.msra.mxu0 %v480
    %655 = vmatprep.subr.mxu0 %v485
    %656 = vmatpush1.msra.mxu0 %v484
    %657 = vmatprep.subr.mxu0 %v489
    %658 = vmatpush1.msra.mxu0 %v488
    %659 = vmatprep.subr.mxu0 %v493
    %660 = vmatpush1.msra.mxu0 %v492
    %661 = vmatprep.subr.mxu0 %v497
    %662 = vmatpush1.msra.mxu0 %v496
    %663 = vmatprep.subr.mxu0 %v501
    %664 = vmatpush1.msra.mxu0 %v500
    %665 = vmatprep.subr.mxu0 %v505
    %666 = vmatpush1.msra.mxu0 %v504
    %667 = vmatprep.subr.mxu0 %v509
    %668 = vmatpush1.msra.mxu0 %v508
    %669 = vmatprep.mubr.f32.mxu0 %v255
    %670 = vmatmul.mubr.f32.gmra.mrb[0].mxu0 %v254
    %v671 = vpop.f32.mrb[0].mxu0
    %v672 = vadd.f32 %v601, %v671
    %v673 = vpop.f32.mrb[0].mxu0
    %v674 = vadd.f32 %v603, %v673
    %675 = vdwg.mxu0
    %676 = vmatprep.subr.mxu0 %v259
    %677 = vmatpush1.msra.mxu0 %v258
    %678 = vmatprep.subr.mxu0 %v263
    %679 = vmatpush1.msra.mxu0 %v262
    %680 = vmatprep.subr.mxu0 %v267
    %681 = vmatpush1.msra.mxu0 %v266
    %682 = vmatprep.subr.mxu0 %v271
    %683 = vmatpush1.msra.mxu0 %v270
    %684 = vmatprep.subr.mxu0 %v275
    %685 = vmatpush1.msra.mxu0 %v274
    %686 = vmatprep.subr.mxu0 %v279
    %687 = vmatpush1.msra.mxu0 %v278
    %688 = vmatprep.subr.mxu0 %v283
    %689 = vmatpush1.msra.mxu0 %v282
    %690 = vmatprep.subr.mxu0 %v287
    %691 = vmatpush1.msra.mxu0 %v286
    %692 = vmatprep.subr.mxu0 %v291
    %693 = vmatpush1.msra.mxu0 %v290
    %694 = vmatprep.subr.mxu0 %v295
    %695 = vmatpush1.msra.mxu0 %v294
    %696 = vmatprep.subr.mxu0 %v299
    %697 = vmatpush1.msra.mxu0 %v298
    %698 = vmatprep.subr.mxu0 %v303
    %699 = vmatpush1.msra.mxu0 %v302
    %700 = vmatprep.subr.mxu0 %v307
    %701 = vmatpush1.msra.mxu0 %v306
    %702 = vmatprep.subr.mxu0 %v311
    %703 = vmatpush1.msra.mxu0 %v310
    %704 = vmatprep.subr.mxu0 %v315
    %705 = vmatpush1.msra.mxu0 %v314
    %706 = vmatprep.subr.mxu0 %v319
    %707 = vmatpush1.msra.mxu0 %v318
    %708 = vmatprep.subr.mxu0 %v323
    %709 = vmatpush1.msra.mxu0 %v322
    %710 = vmatprep.subr.mxu0 %v327
    %711 = vmatpush1.msra.mxu0 %v326
    %712 = vmatprep.subr.mxu0 %v331
    %713 = vmatpush1.msra.mxu0 %v330
    %714 = vmatprep.subr.mxu0 %v335
    %715 = vmatpush1.msra.mxu0 %v334
    %716 = vmatprep.subr.mxu0 %v339
    %717 = vmatpush1.msra.mxu0 %v338
    %718 = vmatprep.subr.mxu0 %v343
    %719 = vmatpush1.msra.mxu0 %v342
    %720 = vmatprep.subr.mxu0 %v347
    %721 = vmatpush1.msra.mxu0 %v346
    %722 = vmatprep.subr.mxu0 %v351
    %723 = vmatpush1.msra.mxu0 %v350
    %724 = vmatprep.subr.mxu0 %v355
    %725 = vmatpush1.msra.mxu0 %v354
    %726 = vmatprep.subr.mxu0 %v359
    %727 = vmatpush1.msra.mxu0 %v358
    %728 = vmatprep.subr.mxu0 %v363
    %729 = vmatpush1.msra.mxu0 %v362
    %730 = vmatprep.subr.mxu0 %v367
    %731 = vmatpush1.msra.mxu0 %v366
    %732 = vmatprep.subr.mxu0 %v371
    %733 = vmatpush1.msra.mxu0 %v370
    %734 = vmatprep.subr.mxu0 %v375
    %735 = vmatpush1.msra.mxu0 %v374
    %736 = vmatprep.subr.mxu0 %v379
    %737 = vmatpush1.msra.mxu0 %v378
    %738 = vmatprep.subr.mxu0 %v383
    %739 = vmatpush1.msra.mxu0 %v382
    %740 = vmatprep.mubr.f32.mxu0 %v253
    %741 = vmatmul.mubr.f32.gmra.mrb[0].mxu0 %v252
    %v742 = vpop.f32.mrb[0].mxu0
    %v743 = vadd.f32 %v525, %v742
    %v744 = vpop.f32.mrb[0].mxu0
    %v745 = vadd.f32 %v529, %v744
    %746 = vdwg.mxu0
    %747 = vmatprep.subr.mxu0 %v387
    %748 = vmatpush1.msra.mxu0 %v386
    %749 = vmatprep.subr.mxu0 %v391
    %750 = vmatpush1.msra.mxu0 %v390
    %751 = vmatprep.subr.mxu0 %v395
    %752 = vmatpush1.msra.mxu0 %v394
    %753 = vmatprep.subr.mxu0 %v399
    %754 = vmatpush1.msra.mxu0 %v398
    %755 = vmatprep.subr.mxu0 %v403
    %756 = vmatpush1.msra.mxu0 %v402
    %757 = vmatprep.subr.mxu0 %v407
    %758 = vmatpush1.msra.mxu0 %v406
    %759 = vmatprep.subr.mxu0 %v411
    %760 = vmatpush1.msra.mxu0 %v410
    %761 = vmatprep.subr.mxu0 %v415
    %762 = vmatpush1.msra.mxu0 %v414
    %763 = vmatprep.subr.mxu0 %v419
    %764 = vmatpush1.msra.mxu0 %v418
    %765 = vmatprep.subr.mxu0 %v423
    %766 = vmatpush1.msra.mxu0 %v422
    %767 = vmatprep.subr.mxu0 %v427
    %768 = vmatpush1.msra.mxu0 %v426
    %769 = vmatprep.subr.mxu0 %v431
    %770 = vmatpush1.msra.mxu0 %v430
    %771 = vmatprep.subr.mxu0 %v435
    %772 = vmatpush1.msra.mxu0 %v434
    %773 = vmatprep.subr.mxu0 %v439
    %774 = vmatpush1.msra.mxu0 %v438
    %775 = vmatprep.subr.mxu0 %v443
    %776 = vmatpush1.msra.mxu0 %v442
    %777 = vmatprep.subr.mxu0 %v447
    %778 = vmatpush1.msra.mxu0 %v446
    %779 = vmatprep.subr.mxu0 %v451
    %780 = vmatpush1.msra.mxu0 %v450
    %781 = vmatprep.subr.mxu0 %v455
    %782 = vmatpush1.msra.mxu0 %v454
    %783 = vmatprep.subr.mxu0 %v459
    %784 = vmatpush1.msra.mxu0 %v458
    %785 = vmatprep.subr.mxu0 %v463
    %786 = vmatpush1.msra.mxu0 %v462
    %787 = vmatprep.subr.mxu0 %v467
    %788 = vmatpush1.msra.mxu0 %v466
    %789 = vmatprep.subr.mxu0 %v471
    %790 = vmatpush1.msra.mxu0 %v470
    %791 = vmatprep.subr.mxu0 %v475
    %792 = vmatpush1.msra.mxu0 %v474
    %793 = vmatprep.subr.mxu0 %v479
    %794 = vmatpush1.msra.mxu0 %v478
    %795 = vmatprep.subr.mxu0 %v483
    %796 = vmatpush1.msra.mxu0 %v482
    %797 = vmatprep.subr.mxu0 %v487
    %798 = vmatpush1.msra.mxu0 %v486
    %799 = vmatprep.subr.mxu0 %v491
    %800 = vmatpush1.msra.mxu0 %v490
    %801 = vmatprep.subr.mxu0 %v495
    %802 = vmatpush1.msra.mxu0 %v494
    %803 = vmatprep.subr.mxu0 %v499
    %804 = vmatpush1.msra.mxu0 %v498
    %805 = vmatprep.subr.mxu0 %v503
    %806 = vmatpush1.msra.mxu0 %v502
    %807 = vmatprep.subr.mxu0 %v507
    %808 = vmatpush1.msra.mxu0 %v506
    %809 = vmatprep.subr.mxu0 %v511
    %810 = vmatpush1.msra.mxu0 %v510
    %811 = vmatprep.mubr.f32.mxu0 %v255
    %812 = vmatmul.mubr.f32.gmra.mrb[0].mxu0 %v254
    %v813 = vpop.f32.mrb[0].mxu0
    %v814 = vadd.f32 %v743, %v813
    %v815 = vpop.f32.mrb[0].mxu0
    %v816 = vadd.f32 %v745, %v815
    %817 = vdwg.mxu0
    %v818 = vmax.f32 %v672, 0.0
    %v819 = vmax.f32 %v674, 0.0
    %v820 = vmax.f32 %v814, 0.0
    %v821 = vmax.f32 %v816, 0.0
    %v822 = vld [vmem:[#allocation6] sm:$0xff]
    %v823 = vld [vmem:[#allocation6 + $0x8] sm:$0xff]
    %v824 = vld [vmem:[#allocation6 + $0x10] sm:$0xff]
    %v825 = vld [vmem:[#allocation6 + $0x18] sm:$0xff]
    %v826 = vld [vmem:[#allocation6 + $0x20] sm:$0xff]
    %v827 = vld [vmem:[#allocation6 + $0x28] sm:$0xff]
    %v828 = vld [vmem:[#allocation6 + $0x30] sm:$0xff]
    %v829 = vld [vmem:[#allocation6 + $0x38] sm:$0xff]
    %v830 = vld [vmem:[#allocation6 + $0x40] sm:$0xff]
    %v831 = vld [vmem:[#allocation6 + $0x48] sm:$0xff]
    %v832 = vld [vmem:[#allocation6 + $0x50] sm:$0xff]
    %v833 = vld [vmem:[#allocation6 + $0x58] sm:$0xff]
    %v834 = vld [vmem:[#allocation6 + $0x60] sm:$0xff]
    %v835 = vld [vmem:[#allocation6 + $0x68] sm:$0xff]
    %v836 = vld [vmem:[#allocation6 + $0x70] sm:$0xff]
    %v837 = vld [vmem:[#allocation6 + $0x78] sm:$0xff]
    %v838 = vld [vmem:[#allocation6 + $0x80] sm:$0xff]
    %v839 = vld [vmem:[#allocation6 + $0x88] sm:$0xff]
    %v840 = vld [vmem:[#allocation6 + $0x90] sm:$0xff]
    %v841 = vld [vmem:[#allocation6 + $0x98] sm:$0xff]
    %v842 = vld [vmem:[#allocation6 + $0xa0] sm:$0xff]
    %v843 = vld [vmem:[#allocation6 + $0xa8] sm:$0xff]
    %v844 = vld [vmem:[#allocation6 + $0xb0] sm:$0xff]
    %v845 = vld [vmem:[#allocation6 + $0xb8] sm:$0xff]
    %v846 = vld [vmem:[#allocation6 + $0xc0] sm:$0xff]
    %v847 = vld [vmem:[#allocation6 + $0xc8] sm:$0xff]
    %v848 = vld [vmem:[#allocation6 + $0xd0] sm:$0xff]
    %v849 = vld [vmem:[#allocation6 + $0xd8] sm:$0xff]
    %v850 = vld [vmem:[#allocation6 + $0xe0] sm:$0xff]
    %v851 = vld [vmem:[#allocation6 + $0xe8] sm:$0xff]
    %v852 = vld [vmem:[#allocation6 + $0xf0] sm:$0xff]
    %v853 = vld [vmem:[#allocation6 + $0xf8] sm:$0xff]
    %v854 = vld [vmem:[#allocation6 + $0x100] sm:$0xff]
    %v855 = vld [vmem:[#allocation6 + $0x108] sm:$0xff]
    %v856 = vld [vmem:[#allocation6 + $0x110] sm:$0xff]
    %v857 = vld [vmem:[#allocation6 + $0x118] sm:$0xff]
    %v858 = vld [vmem:[#allocation6 + $0x120] sm:$0xff]
    %v859 = vld [vmem:[#allocation6 + $0x128] sm:$0xff]
    %v860 = vld [vmem:[#allocation6 + $0x130] sm:$0xff]
    %v861 = vld [vmem:[#allocation6 + $0x138] sm:$0xff]
    %v862 = vld [vmem:[#allocation6 + $0x140] sm:$0xff]
    %v863 = vld [vmem:[#allocation6 + $0x148] sm:$0xff]
    %v864 = vld [vmem:[#allocation6 + $0x150] sm:$0xff]
    %v865 = vld [vmem:[#allocation6 + $0x158] sm:$0xff]
    %v866 = vld [vmem:[#allocation6 + $0x160] sm:$0xff]
    %v867 = vld [vmem:[#allocation6 + $0x168] sm:$0xff]
    %v868 = vld [vmem:[#allocation6 + $0x170] sm:$0xff]
    %v869 = vld [vmem:[#allocation6 + $0x178] sm:$0xff]
    %v870 = vld [vmem:[#allocation6 + $0x180] sm:$0xff]
    %v871 = vld [vmem:[#allocation6 + $0x188] sm:$0xff]
    %v872 = vld [vmem:[#allocation6 + $0x190] sm:$0xff]
    %v873 = vld [vmem:[#allocation6 + $0x198] sm:$0xff]
    %v874 = vld [vmem:[#allocation6 + $0x1a0] sm:$0xff]
    %v875 = vld [vmem:[#allocation6 + $0x1a8] sm:$0xff]
    %v876 = vld [vmem:[#allocation6 + $0x1b0] sm:$0xff]
    %v877 = vld [vmem:[#allocation6 + $0x1b8] sm:$0xff]
    %v878 = vld [vmem:[#allocation6 + $0x1c0] sm:$0xff]
    %v879 = vld [vmem:[#allocation6 + $0x1c8] sm:$0xff]
    %v880 = vld [vmem:[#allocation6 + $0x1d0] sm:$0xff]
    %v881 = vld [vmem:[#allocation6 + $0x1d8] sm:$0xff]
    %v882 = vld [vmem:[#allocation6 + $0x1e0] sm:$0xff]
    %v883 = vld [vmem:[#allocation6 + $0x1e8] sm:$0xff]
    %v884 = vld [vmem:[#allocation6 + $0x1f0] sm:$0xff]
    %v885 = vld [vmem:[#allocation6 + $0x1f8] sm:$0xff]
    %v886 = vld [vmem:[%s6] sm:$0x1]
    %v888 = vlaneseq
    %v889 = vshrl.u32 %v888, 7
    %v890 = vsub.s32 0, %v889
    %v891 = vrot.slane %v886, %v890
    %893 = vmatprep.subr.mxu0 0.0
    %894 = vmatpush1.msra.mxu0 %v822
    %895 = vmatprep.subr.mxu0 0.0
    %896 = vmatpush1.msra.mxu0 %v823
    %897 = vmatprep.subr.mxu0 0.0
    %898 = vmatpush1.msra.mxu0 %v824
    %899 = vmatprep.subr.mxu0 0.0
    %900 = vmatpush1.msra.mxu0 %v825
    %901 = vmatprep.subr.mxu0 0.0
    %902 = vmatpush1.msra.mxu0 %v826
    %903 = vmatprep.subr.mxu0 0.0
    %904 = vmatpush1.msra.mxu0 %v827
    %905 = vmatprep.subr.mxu0 0.0
    %906 = vmatpush1.msra.mxu0 %v828
    %907 = vmatprep.subr.mxu0 0.0
    %908 = vmatpush1.msra.mxu0 %v829
    %909 = vmatprep.subr.mxu0 0.0
    %910 = vmatpush1.msra.mxu0 %v830
    %911 = vmatprep.subr.mxu0 0.0
    %912 = vmatpush1.msra.mxu0 %v831
    %913 = vmatprep.subr.mxu0 0.0
    %914 = vmatpush1.msra.mxu0 %v832
    %915 = vmatprep.subr.mxu0 0.0
    %916 = vmatpush1.msra.mxu0 %v833
    %917 = vmatprep.subr.mxu0 0.0
    %918 = vmatpush1.msra.mxu0 %v834
    %919 = vmatprep.subr.mxu0 0.0
    %920 = vmatpush1.msra.mxu0 %v835
    %921 = vmatprep.subr.mxu0 0.0
    %922 = vmatpush1.msra.mxu0 %v836
    %923 = vmatprep.subr.mxu0 0.0
    %924 = vmatpush1.msra.mxu0 %v837
    %925 = vmatprep.subr.mxu0 0.0
    %926 = vmatpush1.msra.mxu0 %v838
    %927 = vmatprep.subr.mxu0 0.0
    %928 = vmatpush1.msra.mxu0 %v839
    %929 = vmatprep.subr.mxu0 0.0
    %930 = vmatpush1.msra.mxu0 %v840
    %931 = vmatprep.subr.mxu0 0.0
    %932 = vmatpush1.msra.mxu0 %v841
    %933 = vmatprep.subr.mxu0 0.0
    %934 = vmatpush1.msra.mxu0 %v842
    %935 = vmatprep.subr.mxu0 0.0
    %936 = vmatpush1.msra.mxu0 %v843
    %937 = vmatprep.subr.mxu0 0.0
    %938 = vmatpush1.msra.mxu0 %v844
    %939 = vmatprep.subr.mxu0 0.0
    %940 = vmatpush1.msra.mxu0 %v845
    %941 = vmatprep.subr.mxu0 0.0
    %942 = vmatpush1.msra.mxu0 %v846
    %943 = vmatprep.subr.mxu0 0.0
    %944 = vmatpush1.msra.mxu0 %v847
    %945 = vmatprep.subr.mxu0 0.0
    %946 = vmatpush1.msra.mxu0 %v848
    %947 = vmatprep.subr.mxu0 0.0
    %948 = vmatpush1.msra.mxu0 %v849
    %949 = vmatprep.subr.mxu0 0.0
    %950 = vmatpush1.msra.mxu0 %v850
    %951 = vmatprep.subr.mxu0 0.0
    %952 = vmatpush1.msra.mxu0 %v851
    %953 = vmatprep.subr.mxu0 0.0
    %954 = vmatpush1.msra.mxu0 %v852
    %955 = vmatprep.subr.mxu0 0.0
    %956 = vmatpush1.msra.mxu0 %v853
    %957 = vmatprep.mubr.f32.mxu0 %v819
    %958 = vmatmul.mubr.f32.gmra.mrb[0].mxu0 %v818
    %v959 = vpop.f32.mrb[0].mxu0
    %v960 = vadd.f32 %v891, %v959
    %v961 = vpop.f32.mrb[0].mxu0
    %962 = vdwg.mxu0
    %963 = vmatprep.subr.mxu0 0.0
    %964 = vmatpush1.msra.mxu0 %v854
    %965 = vmatprep.subr.mxu0 0.0
    %966 = vmatpush1.msra.mxu0 %v855
    %967 = vmatprep.subr.mxu0 0.0
    %968 = vmatpush1.msra.mxu0 %v856
    %969 = vmatprep.subr.mxu0 0.0
    %970 = vmatpush1.msra.mxu0 %v857
    %971 = vmatprep.subr.mxu0 0.0
    %972 = vmatpush1.msra.mxu0 %v858
    %973 = vmatprep.subr.mxu0 0.0
    %974 = vmatpush1.msra.mxu0 %v859
    %975 = vmatprep.subr.mxu0 0.0
    %976 = vmatpush1.msra.mxu0 %v860
    %977 = vmatprep.subr.mxu0 0.0
    %978 = vmatpush1.msra.mxu0 %v861
    %979 = vmatprep.subr.mxu0 0.0
    %980 = vmatpush1.msra.mxu0 %v862
    %981 = vmatprep.subr.mxu0 0.0
    %982 = vmatpush1.msra.mxu0 %v863
    %983 = vmatprep.subr.mxu0 0.0
    %984 = vmatpush1.msra.mxu0 %v864
    %985 = vmatprep.subr.mxu0 0.0
    %986 = vmatpush1.msra.mxu0 %v865
    %987 = vmatprep.subr.mxu0 0.0
    %988 = vmatpush1.msra.mxu0 %v866
    %989 = vmatprep.subr.mxu0 0.0
    %990 = vmatpush1.msra.mxu0 %v867
    %991 = vmatprep.subr.mxu0 0.0
    %992 = vmatpush1.msra.mxu0 %v868
    %993 = vmatprep.subr.mxu0 0.0
    %994 = vmatpush1.msra.mxu0 %v869
    %995 = vmatprep.subr.mxu0 0.0
    %996 = vmatpush1.msra.mxu0 %v870
    %997 = vmatprep.subr.mxu0 0.0
    %998 = vmatpush1.msra.mxu0 %v871
    %999 = vmatprep.subr.mxu0 0.0
    %1000 = vmatpush1.msra.mxu0 %v872
    %1001 = vmatprep.subr.mxu0 0.0
    %1002 = vmatpush1.msra.mxu0 %v873
    %1003 = vmatprep.subr.mxu0 0.0
    %1004 = vmatpush1.msra.mxu0 %v874
    %1005 = vmatprep.subr.mxu0 0.0
    %1006 = vmatpush1.msra.mxu0 %v875
    %1007 = vmatprep.subr.mxu0 0.0
    %1008 = vmatpush1.msra.mxu0 %v876
    %1009 = vmatprep.subr.mxu0 0.0
    %1010 = vmatpush1.msra.mxu0 %v877
    %1011 = vmatprep.subr.mxu0 0.0
    %1012 = vmatpush1.msra.mxu0 %v878
    %1013 = vmatprep.subr.mxu0 0.0
    %1014 = vmatpush1.msra.mxu0 %v879
    %1015 = vmatprep.subr.mxu0 0.0
    %1016 = vmatpush1.msra.mxu0 %v880
    %1017 = vmatprep.subr.mxu0 0.0
    %1018 = vmatpush1.msra.mxu0 %v881
    %1019 = vmatprep.subr.mxu0 0.0
    %1020 = vmatpush1.msra.mxu0 %v882
    %1021 = vmatprep.subr.mxu0 0.0
    %1022 = vmatpush1.msra.mxu0 %v883
    %1023 = vmatprep.subr.mxu0 0.0
    %1024 = vmatpush1.msra.mxu0 %v884
    %1025 = vmatprep.subr.mxu0 0.0
    %1026 = vmatpush1.msra.mxu0 %v885
    %1027 = vmatprep.mubr.f32.mxu0 %v821
    %1028 = vmatmul.mubr.f32.gmra.mrb[0].mxu0 %v820
    %v1029 = vpop.f32.mrb[0].mxu0
    %v1030 = vadd.f32 %v960, %v1029
    %v1031 = vpop.f32.mrb[0].mxu0
    %1032 = vdwg.mxu0
    %1033 = vst [vmem:[%s7] sm:$0xff] %v1030
    // Predicated region
    $region42: #{aug_prediction_forward.1} parent=1 // pred_check
      _
    $region43: #{aug_prediction_forward.1} parent=1 // pred_check_branch
      %1035 = sbr.rel (0) target = $region45
    $region44: #{aug_prediction_forward.1} parent=1 // pred_region
      _
    $region45: #{aug_prediction_forward.1} parent=1 // pred_fallthru
      _
    // Predicated region
    $region46: #{aug_prediction_forward.1} parent=1 // pred_check
      _
    $region47: #{aug_prediction_forward.1} parent=1 // pred_check_branch
      %1037 = sbr.rel (0) target = $region49
    $region48: #{aug_prediction_forward.1} parent=1 // pred_region
      _
    $region49: #{aug_prediction_forward.1} parent=1 // pred_fallthru
      _
    %1038 = vsyncpa [#allocation3], 1
    %1039 = vsyncpa [#allocation5], 1

</llo_original>
